<compile_context>
chip_gen: v6e
topology: v6e:2x2x1
jax: 0.10.0
libtpu: 0.0.40
codegen_flags: <defaults>
</compile_context>

<pallas_src>
import math

import jax
import jax.numpy as jnp
from jax.experimental import pallas as pl
from jax.experimental.pallas import tpu as pltpu


def _round_up(v, m):
    return (v + m - 1) // m * m


def patch_proj_kernel(p_ref, w_ref, pos_ref, o_ref):
    # p_ref:   (tile_m, K_pad)   patch rows for bpt whole images
    # w_ref:   (K_pad, tile_e)   flattened conv weight slice (resident)
    # pos_ref: (tile_m, tile_e)  (pos[1:] + conv bias), tiled bpt times (resident)
    # o_ref:   (tile_m, tile_e)
    o_ref[...] = (
        jnp.dot(p_ref[...], w_ref[...], preferred_element_type=jnp.float32)
        + pos_ref[...]
    ).astype(o_ref.dtype)


def patch_embedding(x, w_conv, b_conv, cls_token, pos_embed, patch_size,
                    compute_dtype=jnp.float32, out_dtype=jnp.float32):
    """x: [B, C, H, W] (NCHW). Returns [B, num_patches + 1, E] in out_dtype."""
    B, C, H, W = x.shape
    p = patch_size
    Hp, Wp = H // p, W // p
    N = Hp * Wp
    E = w_conv.shape[0]
    K = C * p * p

    K_pad = _round_up(K, 128)
    E_pad = _round_up(E, 128)

    in_bytes = jnp.dtype(compute_dtype).itemsize
    out_bytes = jnp.dtype(out_dtype).itemsize
    VMEM_BUDGET = 24 * 1024 * 1024          # conservative across v5e/v6e/v7x
    VMEM_LIMIT = 48 * 1024 * 1024           # < v7x 64 MiB physical

    def ws_bytes(tile_m, tile_e):
        # Conservative double-buffered estimate (constant-index blocks are
        # counted twice even though Pallas keeps them resident).
        return 2 * (tile_m * K_pad * in_bytes      # patches
                    + K_pad * tile_e * in_bytes    # weight
                    + tile_m * tile_e * 4          # pos (f32)
                    + tile_m * tile_e * out_bytes) # output

    # Minimum images per M-tile so tile_m is sublane (8) aligned.
    r = 8 // math.gcd(N, 8)

    # --- tile_e: keep weight + pos resident whenever they fit ---------------
    tile_e = E_pad
    if ws_bytes(r * N, E_pad) > VMEM_BUDGET:
        for cand in (512, 384, 256, 128):          # divisors of E_pad only
            if E_pad % cand == 0:
                tile_e = cand
                break

    # --- bpt (images per M-tile): target ~1024 rows, shrink to VMEM budget --
    target_rows = 1024
    bpt = max(r, (max(1, target_rows // N) // r) * r)
    while bpt > r and ws_bytes(bpt * N, tile_e) > VMEM_BUDGET:
        bpt = max(r, bpt - r)
    if B <= bpt:
        bpt = B            # single M-tile: full-extent block, no batch padding
    tile_m = bpt * N
    B_pad = _round_up(B, bpt)
    M = B * N
    M_pad = B_pad * N

    # --- XLA preprocessing: patch extraction, padding, parameter prep -------
    # Cast first so the (HBM round-trip) transpose moves compute_dtype bytes.
    # Feature order (c, kh, kw) matches PyTorch's flattened Conv2d weight.
    # TODO(synk): if the activation can be kept NHWC upstream, this transpose
    # becomes lane-contiguous / fusable with the producer.
    xc = x.astype(compute_dtype)
    patches = xc.reshape(B, C, Hp, p, Wp, p).transpose(0, 2, 4, 1, 3, 5)
    patches = patches.reshape(M, K)
    if M_pad != M or K_pad != K:
        patches = jnp.pad(patches, ((0, M_pad - M), (0, K_pad - K)))

    w_flat = w_conv.reshape(E, K).T.astype(compute_dtype)          # (K, E)
    if K_pad != K or E_pad != E:
        w_flat = jnp.pad(w_flat, ((0, K_pad - K), (0, E_pad - E)))

    pos = pos_embed.reshape(N + 1, E).astype(jnp.float32)
    pos_body = pos[1:] + b_conv.astype(jnp.float32)                # (N, E)
    if E_pad != E:
        pos_body = jnp.pad(pos_body, ((0, 0), (0, E_pad - E)))
    pos_tile = jnp.tile(pos_body, (bpt, 1))                 # (tile_m, E_pad)

    # Grid: e outer, m inner -> weight/pos blocks are constant over the inner
    # m sweep (and constant over the whole grid when tile_e == E_pad).
    grid = (E_pad // tile_e, M_pad // tile_m)
    out = pl.pallas_call(
        patch_proj_kernel,
        out_shape=jax.ShapeDtypeStruct((M_pad, E_pad), out_dtype),
        grid_spec=pltpu.PrefetchScalarGridSpec(
            num_scalar_prefetch=0,
            grid=grid,
            in_specs=[
                pl.BlockSpec((tile_m, K_pad), lambda e, m: (m, 0)),
                pl.BlockSpec((K_pad, tile_e), lambda e, m: (0, e)),
                pl.BlockSpec((tile_m, tile_e), lambda e, m: (0, e)),
            ],
            out_specs=pl.BlockSpec((tile_m, tile_e), lambda e, m: (m, e)),
        ),
        compiler_params=pltpu.CompilerParams(
            dimension_semantics=("parallel", "parallel"),
            vmem_limit_bytes=VMEM_LIMIT,
        ),
    )(patches, w_flat, pos_tile)

    body = out[:M, :E].astype(jnp.float32).reshape(B, N, E)     # drop padding
    # Row 0 (cls token) is batch-independent: cls + pos[0], assembled in XLA.
    cls_row = cls_token.reshape(E).astype(jnp.float32) + pos[0]
    cls_rows = jnp.broadcast_to(cls_row, (B, 1, E))
    return jnp.concatenate([cls_rows, body], axis=1).astype(out_dtype)


def reference(x, w_conv, b_conv, cls_token, pos_embed, patch_size):
    """Pure-JAX reference mirroring the PyTorch forward."""
    B, C, H, W = x.shape
    p = patch_size
    Hp, Wp = H // p, W // p
    N = Hp * Wp
    E = w_conv.shape[0]
    patches = x.reshape(B, C, Hp, p, Wp, p).transpose(0, 2, 4, 1, 3, 5)
    patches = patches.reshape(B, N, C * p * p)
    proj = jnp.einsum("bnk,ek->bne", patches, w_conv.reshape(E, -1)) + b_conv
    cls = jnp.broadcast_to(cls_token, (B, 1, E))
    out = jnp.concatenate([cls, proj], axis=1) + pos_embed
    return out


if __name__ == "__main__":
    # Small shapes consistent with the module: img=16, patch=4 -> 16 patches.
    img_size, patch_size, in_channels, embed_size, batch = 16, 4, 4, 32, 2
    num_patches = (img_size // patch_size) ** 2

    key = jax.random.PRNGKey(0)
    k_x, k_w, k_b, k_cls, k_pos = jax.random.split(key, 5)

    x = jax.random.normal(k_x, (batch, in_channels, img_size, img_size),
                          dtype=jnp.float32)
    # Conv2d weight: (out_channels, in_channels, kH, kW); bias: (out_channels,)
    w_conv = jax.random.normal(
        k_w, (embed_size, in_channels, patch_size, patch_size),
        dtype=jnp.float32) * 0.02
    b_conv = jax.random.normal(k_b, (embed_size,), dtype=jnp.float32) * 0.02
    cls_token = jax.random.normal(k_cls, (1, 1, embed_size), dtype=jnp.float32)
    pos_embed = jax.random.normal(k_pos, (1, num_patches + 1, embed_size),
                                  dtype=jnp.float32)

    out = patch_embedding(x, w_conv, b_conv, cls_token, pos_embed, patch_size)
    out = jax.block_until_ready(out)

    ref = reference(x, w_conv, b_conv, cls_token, pos_embed, patch_size)
    assert out.shape == (batch, num_patches + 1, embed_size)
    assert jnp.allclose(out, ref, atol=1e-4, rtol=1e-4)
    print("KERNEL_OK")
</pallas_src>

<mosaic_0001>
module attributes {stable_mosaic.version = 11 : i64} {
  func.func @patch_proj_kernel(%arg0: i32, %arg1: i32, %arg2: memref<32x128xf32, #tpu.memory_space<vmem>>, %arg3: memref<128x128xf32, #tpu.memory_space<vmem>>, %arg4: memref<32x128xf32, #tpu.memory_space<vmem>>, %arg5: memref<32x128xf32, #tpu.memory_space<vmem>>) attributes {dimension_semantics = [#tpu.dimension_semantics<parallel>, #tpu.dimension_semantics<parallel>], iteration_bounds = array<i64: 1, 1>, scalar_prefetch = 0 : i64, scratch_operands = 0 : i64, tpu.core_type = #tpu.core_type<tc>, window_params = [{transform_indices = @transform_0, window_bounds = array<i64: 32, 128>}, {transform_indices = @transform_1, window_bounds = array<i64: 128, 128>}, {transform_indices = @transform_2, window_bounds = array<i64: 32, 128>}, {transform_indices = @transform_3, window_bounds = array<i64: 32, 128>}]} {
    %c0 = arith.constant 0 : index
    %c0_0 = arith.constant 0 : index
    %0 = vector.load %arg2[%c0, %c0_0] : memref<32x128xf32, #tpu.memory_space<vmem>>, vector<32x128xf32>
    %c0_1 = arith.constant 0 : index
    %c0_2 = arith.constant 0 : index
    %1 = vector.load %arg3[%c0_1, %c0_2] : memref<128x128xf32, #tpu.memory_space<vmem>>, vector<128x128xf32>
    %cst = arith.constant dense<0.000000e+00> : vector<32x128xf32>
    %2 = tpu.matmul %0, %1, %cst {dimension_numbers = #tpu.dot_dimension_numbers<[1], [0], [0], [1], [0, 0, 1, 1], [], []>} : vector<32x128xf32>, vector<128x128xf32>, vector<32x128xf32> -> vector<32x128xf32>
    %c0_3 = arith.constant 0 : index
    %c0_4 = arith.constant 0 : index
    %3 = vector.load %arg4[%c0_3, %c0_4] : memref<32x128xf32, #tpu.memory_space<vmem>>, vector<32x128xf32>
    %4 = arith.addf %2, %3 : vector<32x128xf32>
    %c0_5 = arith.constant 0 : index
    %c0_6 = arith.constant 0 : index
    %5 = vector.load %arg5[%c0_5, %c0_6] : memref<32x128xf32, #tpu.memory_space<vmem>>, vector<32x128xf32>
    tpu.vector_store %arg5[%c0_5, %c0_6], %4 {strides = array<i32>} : memref<32x128xf32, #tpu.memory_space<vmem>>, vector<32x128xf32>,
    return
  }
  func.func @transform_0(%arg0: i32, %arg1: i32) -> (i32, i32) {
    %c0_i32 = arith.constant 0 : i32
    %c0_i32_0 = arith.constant 0 : i32
    return %arg1, %c0_i32 : i32, i32
  }
  func.func @transform_1(%arg0: i32, %arg1: i32) -> (i32, i32) {
    %c0_i32 = arith.constant 0 : i32
    %c0_i32_0 = arith.constant 0 : i32
    return %c0_i32, %arg0 : i32, i32
  }
  func.func @transform_2(%arg0: i32, %arg1: i32) -> (i32, i32) {
    %c0_i32 = arith.constant 0 : i32
    %c0_i32_0 = arith.constant 0 : i32
    return %c0_i32, %arg0 : i32, i32
  }
  func.func @transform_3(%arg0: i32, %arg1: i32) -> (i32, i32) {
    %c0_i32 = arith.constant 0 : i32
    return %arg1, %arg0 : i32, i32
  }
}

</mosaic_0001>

<llo_original>
// kernel: tpu_custom_call.1
$region0: #{tpu_custom_call.1}
  #allocation0 [shape = 'u32[]', space=smem, size = 0x4, offset = 0x4, fixed_abs, tag = 'smem constant byte address 0x4 - core index']
  #allocation1 [shape = 'u32[144,128]{1,0:T(1,128)}', space=vmem, size = 0x12000, scoped, tag = 'internal scratch']
  %s0 = inlined_call_operand.hbm [shape: f32[32,128], index: 0, kind: input, shape index: {}]
  %s1 = inlined_call_operand.hbm [shape: f32[128,128], index: 1, kind: input, shape index: {}]
  %s2 = inlined_call_operand.hbm [shape: f32[32,128], index: 2, kind: input, shape index: {}]
  %s3 = inlined_call_operand.hbm [shape: f32[32,128], index: 3, kind: output, shape index: {}]
  %s4 = sld [smem:[#allocation0]]
  $region34: #{tpu_custom_call.1} parent=0
    _
  %s6 = ssub.s32 1, %s4
  %s7 = scalar_select 0, %s6, %s4
  $region1: #{tpu_custom_call.1} parent=0
    #allocation2 [shape = 'u8[16384]{0}', space=vmem, size = 0x4000, scoped, tag = 'input window, operand 0, single buffered']
    #allocation3 [shape = 's32[1]{0}', space=sflag, size = 0x4, scoped, tag = 'scoped memory for tpu_custom_call.1']
    #allocation4 [shape = 's32[1]{0}', space=sflag, size = 0x4, scoped, tag = 'scoped memory for tpu_custom_call.1']
    #allocation5 [shape = 'u8[65536]{0}', space=vmem, size = 0x10000, scoped, tag = 'input window, operand 1, single buffered']
    #allocation6 [shape = 's32[1]{0}', space=sflag, size = 0x4, scoped, tag = 'scoped memory for tpu_custom_call.1']
    #allocation7 [shape = 'u8[16384]{0}', space=vmem, size = 0x4000, scoped, tag = 'input window, operand 2, single buffered']
    #allocation8 [shape = 'u8[16384]{0}', space=vmem, size = 0x4000, scoped, tag = 'output window, operand 0, single buffered']
    %8 = vsyncpa [#allocation3], 0
    %9 = vsyncpa [#allocation6], 0
    %10 = vsyncpa [#allocation4], 0
    // Predicated region
    $region2: #{tpu_custom_call.1} parent=1 // pred_check
      _
    $region3: #{tpu_custom_call.1} parent=1 // pred_check_branch
      %12 = sbr.rel (0) target = $region5
    $region4: #{tpu_custom_call.1} parent=1 // pred_region
      %s14 = ssub.s32 512, 512
      %15 = vsyncadd [#allocation3], %s14
      %s16 = sshll.u32 [#allocation2], 4
      %s17 = int_to_ptr.vmem [resolvable:$true] %s16
      %22 = dma.hbm_to_vmem [thread:$0]  %s0, 512, %s17, [#allocation3], 128, 128, 8
    $region5: #{tpu_custom_call.1} parent=1 // pred_fallthru
      _
    // Predicated region
    $region6: #{tpu_custom_call.1} parent=1 // pred_check
      _
    $region7: #{tpu_custom_call.1} parent=1 // pred_check_branch
      %24 = sbr.rel (0) target = $region9
    $region8: #{tpu_custom_call.1} parent=1 // pred_region
      %s26 = ssub.s32 2048, 2048
      %27 = vsyncadd [#allocation6], %s26
      %s28 = sshll.u32 [#allocation5], 4
      %s29 = int_to_ptr.vmem [resolvable:$true] %s28
      %34 = dma.hbm_to_vmem [thread:$0]  %s1, 2048, %s29, [#allocation6], 128, 128, 8
    $region9: #{tpu_custom_call.1} parent=1 // pred_fallthru
      _
    // Predicated region
    $region10: #{tpu_custom_call.1} parent=1 // pred_check
      _
    $region11: #{tpu_custom_call.1} parent=1 // pred_check_branch
      %36 = sbr.rel (0) target = $region13
    $region12: #{tpu_custom_call.1} parent=1 // pred_region
      %s38 = ssub.s32 512, 512
      %39 = vsyncadd [#allocation6], %s38
      %s40 = sshll.u32 [#allocation7], 4
      %s41 = int_to_ptr.vmem [resolvable:$true] %s40
      %46 = dma.hbm_to_vmem [thread:$0]  %s2, 512, %s41, [#allocation6], 128, 128, 8
    $region13: #{tpu_custom_call.1} parent=1 // pred_fallthru
      _
    // Predicated region
    $region14: #{tpu_custom_call.1} parent=1 // pred_check
      _
    $region15: #{tpu_custom_call.1} parent=1 // pred_check_branch
      %48 = sbr.rel (0) target = $region17
    $region16: #{tpu_custom_call.1} parent=1 // pred_region
      %49 = dma.done [#allocation3], 512
    $region17: #{tpu_custom_call.1} parent=1 // pred_fallthru
      _
    // Predicated region
    $region18: #{tpu_custom_call.1} parent=1 // pred_check
      _
    $region19: #{tpu_custom_call.1} parent=1 // pred_check_branch
      %51 = sbr.rel (0) target = $region21
    $region20: #{tpu_custom_call.1} parent=1 // pred_region
      %52 = dma.done [#allocation6], 2048
    $region21: #{tpu_custom_call.1} parent=1 // pred_fallthru
      _
    // Predicated region
    $region22: #{tpu_custom_call.1} parent=1 // pred_check
      _
    $region23: #{tpu_custom_call.1} parent=1 // pred_check_branch
      %54 = sbr.rel (0) target = $region25
    $region24: #{tpu_custom_call.1} parent=1 // pred_region
      %55 = dma.done [#allocation6], 512
    $region25: #{tpu_custom_call.1} parent=1 // pred_fallthru
      _
    %v56 = vld [vmem:[#allocation2] sm:$0xff]
    %v57 = vld [vmem:[#allocation2 + $0x8] sm:$0xff]
    %v58 = vld [vmem:[#allocation2 + $0x10] sm:$0xff]
    %v59 = vld [vmem:[#allocation2 + $0x18] sm:$0xff]
    %v60 = vld [vmem:[#allocation5] sm:$0xff]
    %v61 = vld [vmem:[#allocation5 + $0x8] sm:$0xff]
    %v62 = vld [vmem:[#allocation5 + $0x10] sm:$0xff]
    %v63 = vld [vmem:[#allocation5 + $0x18] sm:$0xff]
    %v64 = vld [vmem:[#allocation5 + $0x20] sm:$0xff]
    %v65 = vld [vmem:[#allocation5 + $0x28] sm:$0xff]
    %v66 = vld [vmem:[#allocation5 + $0x30] sm:$0xff]
    %v67 = vld [vmem:[#allocation5 + $0x38] sm:$0xff]
    %v68 = vld [vmem:[#allocation5 + $0x40] sm:$0xff]
    %v69 = vld [vmem:[#allocation5 + $0x48] sm:$0xff]
    %v70 = vld [vmem:[#allocation5 + $0x50] sm:$0xff]
    %v71 = vld [vmem:[#allocation5 + $0x58] sm:$0xff]
    %v72 = vld [vmem:[#allocation5 + $0x60] sm:$0xff]
    %v73 = vld [vmem:[#allocation5 + $0x68] sm:$0xff]
    %v74 = vld [vmem:[#allocation5 + $0x70] sm:$0xff]
    %v75 = vld [vmem:[#allocation5 + $0x78] sm:$0xff]
    %v76 = vld [vmem:[#allocation7] sm:$0xff]
    %v77 = vld [vmem:[#allocation7 + $0x8] sm:$0xff]
    %v78 = vld [vmem:[#allocation7 + $0x10] sm:$0xff]
    %v79 = vld [vmem:[#allocation7 + $0x18] sm:$0xff]
    %80 = vmatprep.subr.mxu0 0.0
    %81 = vmatpush1.msra.mxu0 %v75
    %82 = vmatprep.subr.mxu0 0.0
    %83 = vmatpush1.msra.mxu0 %v74
    %84 = vmatprep.subr.mxu0 0.0
    %85 = vmatpush1.msra.mxu0 %v73
    %86 = vmatprep.subr.mxu0 0.0
    %87 = vmatpush1.msra.mxu0 %v72
    %88 = vmatprep.subr.mxu0 0.0
    %89 = vmatpush1.msra.mxu0 %v71
    %90 = vmatprep.subr.mxu0 0.0
    %91 = vmatpush1.msra.mxu0 %v70
    %92 = vmatprep.subr.mxu0 0.0
    %93 = vmatpush1.msra.mxu0 %v69
    %94 = vmatprep.subr.mxu0 0.0
    %95 = vmatpush1.msra.mxu0 %v68
    %96 = vmatprep.subr.mxu0 0.0
    %97 = vmatpush1.msra.mxu0 %v67
    %98 = vmatprep.subr.mxu0 0.0
    %99 = vmatpush1.msra.mxu0 %v66
    %100 = vmatprep.subr.mxu0 0.0
    %101 = vmatpush1.msra.mxu0 %v65
    %102 = vmatprep.subr.mxu0 0.0
    %103 = vmatpush1.msra.mxu0 %v64
    %104 = vmatprep.subr.mxu0 0.0
    %105 = vmatpush1.msra.mxu0 %v63
    %106 = vmatprep.subr.mxu0 0.0
    %107 = vmatpush1.msra.mxu0 %v62
    %108 = vmatprep.subr.mxu0 0.0
    %109 = vmatpush1.msra.mxu0 %v61
    %110 = vmatprep.subr.mxu0 0.0
    %111 = vmatpush1.msra.mxu0 %v60
    %112 = vmatprep.subr.mxu0 0.0
    %113 = vmatpush2.msra.mxu0 0.0
    %114 = vmatprep.subr.mxu0 0.0
    %115 = vmatpush2.msra.mxu0 0.0
    %116 = vmatprep.subr.mxu0 0.0
    %117 = vmatpush2.msra.mxu0 0.0
    %118 = vmatprep.subr.mxu0 0.0
    %119 = vmatpush2.msra.mxu0 0.0
    %120 = vmatprep.subr.mxu0 0.0
    %121 = vmatpush2.msra.mxu0 0.0
    %122 = vmatprep.subr.mxu0 0.0
    %123 = vmatpush2.msra.mxu0 0.0
    %124 = vmatprep.subr.mxu0 0.0
    %125 = vmatpush2.msra.mxu0 0.0
    %126 = vmatprep.subr.mxu0 0.0
    %127 = vmatpush2.msra.mxu0 0.0
    %128 = vmatprep.subr.mxu0 0.0
    %129 = vmatpush2.msra.mxu0 0.0
    %130 = vmatprep.subr.mxu0 0.0
    %131 = vmatpush2.msra.mxu0 0.0
    %132 = vmatprep.subr.mxu0 0.0
    %133 = vmatpush2.msra.mxu0 0.0
    %134 = vmatprep.subr.mxu0 0.0
    %135 = vmatpush2.msra.mxu0 0.0
    %136 = vmatprep.subr.mxu0 0.0
    %137 = vmatpush2.msra.mxu0 0.0
    %138 = vmatprep.subr.mxu0 0.0
    %139 = vmatpush2.msra.mxu0 0.0
    %140 = vmatprep.subr.mxu0 0.0
    %141 = vmatpush2.msra.mxu0 0.0
    %142 = vmatprep.subr.mxu0 0.0
    %143 = vmatpush2.msra.mxu0 0.0
    %144 = vmatprep.mubr.f32.mxu0 0.0
    %145 = vmatmul.mubr.f32.gmra.mxu0 %v56
    %v146 = vpop.f32.mrf.mxu0
    %v147 = vadd.f32 %v76, %v146
    %v148 = vpop.f32.mrf.mxu0
    %149 = vmatprep.mubr.f32.mxu0 0.0
    %150 = vmatmul.mubr.f32.gmra.mxu0 %v57
    %v151 = vpop.f32.mrf.mxu0
    %v152 = vadd.f32 %v77, %v151
    %v153 = vpop.f32.mrf.mxu0
    %154 = vmatprep.mubr.f32.mxu0 0.0
    %155 = vmatmul.mubr.f32.gmra.mxu0 %v58
    %v156 = vpop.f32.mrf.mxu0
    %v157 = vadd.f32 %v78, %v156
    %v158 = vpop.f32.mrf.mxu0
    %159 = vmatprep.mubr.f32.mxu0 0.0
    %160 = vmatmul.mubr.f32.gmra.mxu0 %v59
    %v161 = vpop.f32.mrf.mxu0
    %v162 = vadd.f32 %v79, %v161
    %v163 = vpop.f32.mrf.mxu0
    %164 = vdwg.mxu0
    %165 = vst [vmem:[#allocation8] sm:$0xff] %v147
    %166 = vst [vmem:[#allocation8 + $0x8] sm:$0xff] %v152
    %167 = vst [vmem:[#allocation8 + $0x10] sm:$0xff] %v157
    %168 = vst [vmem:[#allocation8 + $0x18] sm:$0xff] %v162
    // Predicated region
    $region26: #{tpu_custom_call.1} parent=1 // pred_check
      _
    $region27: #{tpu_custom_call.1} parent=1 // pred_check_branch
      %170 = sbr.rel (0) target = $region29
    $region28: #{tpu_custom_call.1} parent=1 // pred_region
      %s172 = ssub.s32 512, 512
      %173 = vsyncadd [#allocation4], %s172
      %s174 = sshll.u32 [#allocation8], 4
      %s175 = int_to_ptr.vmem [resolvable:$true] %s174
      %180 = dma.vmem_to_hbm [thread:$0]  %s175, 512, %s3, [#allocation4], 128, 128, 8
    $region29: #{tpu_custom_call.1} parent=1 // pred_fallthru
      _
    // Predicated region
    $region30: #{tpu_custom_call.1} parent=1 // pred_check
      _
    $region31: #{tpu_custom_call.1} parent=1 // pred_check_branch
      %182 = sbr.rel (0) target = $region33
    $region32: #{tpu_custom_call.1} parent=1 // pred_region
      %183 = dma.done [#allocation4], 512
    $region33: #{tpu_custom_call.1} parent=1 // pred_fallthru
      _
    %184 = vsyncpa [#allocation3], 1
    %185 = vsyncpa [#allocation6], 1
    %186 = vsyncpa [#allocation4], 1

</llo_original>
